<compile_context>
chip_gen: v5e
topology: v5e:2x2
jax: 0.10.0
libtpu: 0.0.40
codegen_flags: <defaults>
</compile_context>

<pallas_src>
import jax
import jax.numpy as jnp
from jax.experimental import pallas as pl
from jax.experimental.pallas import tpu as pltpu


def _round_up(x, m):
    return ((x + m - 1) // m) * m


def _link_predictor_kernel(zsrc_ref, zdst_ref, a_ref, u_ref, v_ref, c_ref, out_ref):
    # Activations may be bf16 in HBM; compute in f32 (v5e VPU/EUP have no bf16).
    zs = zsrc_ref[...].astype(jnp.float32)                       # (tm, H)
    zd = zdst_ref[...].astype(jnp.float32)                       # (tm, H)

    # Single small MXU matmul: (tm, H) @ (H, H), f32 accumulation.
    t = jnp.dot(zs, a_ref[...], preferred_element_type=jnp.float32)

    # logit = rowsum(t*zd + zs*u + zd*v) + c   (exactly the folded bilinear form)
    m = t * zd + zs * u_ref[...] + zd * v_ref[...]
    logit = jnp.sum(m, axis=-1) + c_ref[0, 0]

    # Lane-dense (1, tm) output row per grid step.
    out_ref[...] = jax.nn.sigmoid(logit)[None, :].astype(out_ref.dtype)


def link_predictor(z_src, z_dst, w_src, b_src, w_dst, b_dst, w_fin, b_fin,
                   *, tm=None):
    """sigmoid(((z_src@w_src + b_src) * (z_dst@w_dst + b_dst)) @ w_fin + b_fin).

    Weights stored (in, out): w_src/w_dst (H, HEAD), w_fin (HEAD, 1).
    """
    N, H = z_src.shape
    HEAD = w_src.shape[1]

    # --- fold everything into a (H x H) bilinear form, in f32 ------------------
    wf = w_fin.reshape(-1).astype(jnp.float32)                     # (HEAD,)
    ws = w_src.astype(jnp.float32)                                 # (H, HEAD)
    wd_w = w_dst.astype(jnp.float32) * wf[None, :]                 # (H, HEAD)
    bs = b_src.reshape(-1).astype(jnp.float32)                     # (HEAD,)
    bd_w = b_dst.reshape(-1).astype(jnp.float32) * wf              # (HEAD,)

    a_mat = ws @ wd_w.T                                            # (H, H)
    u_row = (ws @ bd_w).reshape(1, H)                              # (1, H)
    v_row = (wd_w @ bs).reshape(1, H)                              # (1, H)
    c_val = (jnp.dot(bs, bd_w) + b_fin.reshape(-1)[0]).reshape(1, 1).astype(jnp.float32)

    # --- tile size: big tiles for large N (HBM roofline), G>=2 for v7x --------
    if tm is None:
        tm = 8192 if z_src.dtype == jnp.bfloat16 else 4096
    assert tm % 256 == 0, "tm should be a multiple of 256"
    if N <= 1024:
        tm_eff = max(8, _round_up(N, 8))                 # single tile, whole batch
    else:
        tm_eff = min(tm, _round_up(pl.cdiv(N, 2), 256))  # at least two tiles
    G = pl.cdiv(N, tm_eff)                               # partial last block is fine

    itemsize = jnp.dtype(z_src.dtype).itemsize
    cost = pl.CostEstimate(
        flops=int(N) * (2 * H * H + 6 * H),
        transcendentals=int(N),
        bytes_accessed=2 * N * H * itemsize + (H * H + 2 * H + 1) * 4 + G * tm_eff * 4,
    )

    out = pl.pallas_call(
        _link_predictor_kernel,
        out_shape=jax.ShapeDtypeStruct((G, 1, tm_eff), jnp.float32),
        grid_spec=pltpu.PrefetchScalarGridSpec(
            num_scalar_prefetch=0,
            grid=(G,),
            in_specs=[
                pl.BlockSpec((tm_eff, H), lambda i: (i, 0)),      # z_src tile
                pl.BlockSpec((tm_eff, H), lambda i: (i, 0)),      # z_dst tile
                pl.BlockSpec((H, H), lambda i: (0, 0)),           # A (resident, f32)
                pl.BlockSpec((1, H), lambda i: (0, 0)),           # u row
                pl.BlockSpec((1, H), lambda i: (0, 0)),           # v row
                pl.BlockSpec(memory_space=pltpu.MemorySpace.SMEM),  # c scalar
            ],
            out_specs=pl.BlockSpec((None, 1, tm_eff), lambda i: (i, 0, 0)),
        ),
        compiler_params=pltpu.CompilerParams(
            dimension_semantics=("parallel",)),
        cost_estimate=cost,
    )(z_src, z_dst, a_mat, u_row, v_row, c_val)

    # Garbage tail rows (from the partial last block) are sliced away here.
    return out.reshape(G * tm_eff, 1)[:N]


def reference(z_src, z_dst, w_src, b_src, w_dst, b_dst, w_fin, b_fin):
    h_src = z_src @ w_src + b_src
    h_dst = z_dst @ w_dst + b_dst
    h = h_src * h_dst
    return jax.nn.sigmoid(h @ w_fin + b_fin)


if __name__ == "__main__":
    HIDDEN = 32
    HEAD = 256        # default head_channel in LinkPredictor
    N = 8             # small batch of (src, dst) pairs

    key = jax.random.PRNGKey(0)
    ks = jax.random.split(key, 8)

    z_src = jax.random.normal(ks[0], (N, HIDDEN), dtype=jnp.float32)
    z_dst = jax.random.normal(ks[1], (N, HIDDEN), dtype=jnp.float32)

    # Deterministic synthetic Linear params (weight stored as (in, out) == W.T).
    w_src = jax.random.normal(ks[2], (HIDDEN, HEAD), dtype=jnp.float32) / jnp.sqrt(HIDDEN)
    b_src = jax.random.normal(ks[3], (1, HEAD), dtype=jnp.float32) * 0.1
    w_dst = jax.random.normal(ks[4], (HIDDEN, HEAD), dtype=jnp.float32) / jnp.sqrt(HIDDEN)
    b_dst = jax.random.normal(ks[5], (1, HEAD), dtype=jnp.float32) * 0.1
    w_fin = jax.random.normal(ks[6], (HEAD, 1), dtype=jnp.float32) / jnp.sqrt(HEAD)
    b_fin = jax.random.normal(ks[7], (1, 1), dtype=jnp.float32) * 0.1

    ref = reference(z_src, z_dst, w_src, b_src, w_dst, b_dst, w_fin, b_fin)

    # f32 path
    out = link_predictor(z_src, z_dst, w_src, b_src, w_dst, b_dst, w_fin, b_fin)
    out = jax.block_until_ready(out)
    assert out.shape == (N, 1)
    assert jnp.allclose(out, ref, atol=2e-4, rtol=1e-4), "f32 mismatch vs reference"

    # Ragged batch (N not a multiple of 8): exercises the partial last block
    # (no wrapper-side padding of the activations).
    N2 = 13
    zs2 = jax.random.normal(ks[0], (N2, HIDDEN), dtype=jnp.float32)
    zd2 = jax.random.normal(ks[1], (N2, HIDDEN), dtype=jnp.float32)
    ref2 = reference(zs2, zd2, w_src, b_src, w_dst, b_dst, w_fin, b_fin)
    out2 = link_predictor(zs2, zd2, w_src, b_src, w_dst, b_dst, w_fin, b_fin)
    out2 = jax.block_until_ready(out2)
    assert out2.shape == (N2, 1)
    assert jnp.allclose(out2, ref2, atol=2e-4, rtol=1e-4), "ragged f32 mismatch"

    # bf16 activations/weights (halves HBM traffic; fold + accumulation stay f32).
    out_bf16 = link_predictor(
        z_src.astype(jnp.bfloat16), z_dst.astype(jnp.bfloat16),
        w_src.astype(jnp.bfloat16), b_src,
        w_dst.astype(jnp.bfloat16), b_dst, w_fin, b_fin)
    out_bf16 = jax.block_until_ready(out_bf16)
    assert out_bf16.shape == (N, 1)
    assert jnp.allclose(out_bf16, ref, atol=3e-2), "bf16 mismatch vs reference"

    print("KERNEL_OK")
</pallas_src>

<mosaic_0001>
module attributes {stable_mosaic.version = 11 : i64} {
  func.func @_link_predictor_kernel(%arg0: i32, %arg1: memref<8x32xf32, #tpu.memory_space<vmem>>, %arg2: memref<8x32xf32, #tpu.memory_space<vmem>>, %arg3: memref<32x32xf32, #tpu.memory_space<vmem>>, %arg4: memref<1x32xf32, #tpu.memory_space<vmem>>, %arg5: memref<1x32xf32, #tpu.memory_space<vmem>>, %arg6: memref<1x1xf32, #tpu.memory_space<smem>>, %arg7: memref<1x1x8xf32, #tpu.memory_space<vmem>>) attributes {dimension_semantics = [#tpu.dimension_semantics<parallel>], iteration_bounds = array<i64: 1>, scalar_prefetch = 0 : i64, scratch_operands = 0 : i64, tpu.core_type = #tpu.core_type<tc>, window_params = [{transform_indices = @transform_0, window_bounds = array<i64: 8, 32>}, {transform_indices = @transform_1, window_bounds = array<i64: 8, 32>}, {pipeline_mode = #tpu.pipeline_mode<synchronous>, transform_indices = @transform_2, window_bounds = array<i64: 32, 32>}, {pipeline_mode = #tpu.pipeline_mode<synchronous>, transform_indices = @transform_3, window_bounds = array<i64: 1, 32>}, {pipeline_mode = #tpu.pipeline_mode<synchronous>, transform_indices = @transform_4, window_bounds = array<i64: 1, 32>}, {transform_indices = @transform_5, window_bounds = array<i64: 1, 1>}, {transform_indices = @transform_6, window_bounds = array<i64: 1, 1, 8>}]} {
    %c0 = arith.constant 0 : index
    %c0_0 = arith.constant 0 : index
    %0 = vector.load %arg1[%c0, %c0_0] : memref<8x32xf32, #tpu.memory_space<vmem>>, vector<8x32xf32>
    %c0_1 = arith.constant 0 : index
    %c0_2 = arith.constant 0 : index
    %1 = vector.load %arg2[%c0_1, %c0_2] : memref<8x32xf32, #tpu.memory_space<vmem>>, vector<8x32xf32>
    %c0_3 = arith.constant 0 : index
    %c0_4 = arith.constant 0 : index
    %2 = vector.load %arg3[%c0_3, %c0_4] : memref<32x32xf32, #tpu.memory_space<vmem>>, vector<32x32xf32>
    %cst = arith.constant dense<0.000000e+00> : vector<8x32xf32>
    %3 = tpu.matmul %0, %2, %cst {dimension_numbers = #tpu.dot_dimension_numbers<[1], [0], [0], [1], [0, 0, 1, 1], [], []>} : vector<8x32xf32>, vector<32x32xf32>, vector<8x32xf32> -> vector<8x32xf32>
    %4 = arith.mulf %3, %1 : vector<8x32xf32>
    %c0_5 = arith.constant 0 : index
    %c0_6 = arith.constant 0 : index
    %5 = vector.load %arg4[%c0_5, %c0_6] : memref<1x32xf32, #tpu.memory_space<vmem>>, vector<1x32xf32>
    %6 = vector.broadcast %5 : vector<1x32xf32> to vector<8x32xf32>
    %7 = arith.mulf %0, %6 : vector<8x32xf32>
    %8 = arith.addf %4, %7 : vector<8x32xf32>
    %c0_7 = arith.constant 0 : index
    %c0_8 = arith.constant 0 : index
    %9 = vector.load %arg5[%c0_7, %c0_8] : memref<1x32xf32, #tpu.memory_space<vmem>>, vector<1x32xf32>
    %10 = vector.broadcast %9 : vector<1x32xf32> to vector<8x32xf32>
    %11 = arith.mulf %1, %10 : vector<8x32xf32>
    %12 = arith.addf %8, %11 : vector<8x32xf32>
    %cst_9 = arith.constant dense<0.000000e+00> : vector<8xf32>
    %13 = vector.multi_reduction <add>, %12, %cst_9 [1] : vector<8x32xf32> to vector<8xf32>
    %c0_10 = arith.constant 0 : index
    %c0_11 = arith.constant 0 : index
    %14 = memref.load %arg6[%c0_10, %c0_11] : memref<1x1xf32, #tpu.memory_space<smem>>
    %15 = vector.broadcast %14 : f32 to vector<8xf32>
    %16 = arith.addf %13, %15 : vector<8xf32>
    %17 = arith.negf %16 : vector<8xf32>
    %18 = math.exp %17 : vector<8xf32>
    %cst_12 = arith.constant 1.000000e+00 : f32
    %19 = vector.broadcast %cst_12 : f32 to vector<8xf32>
    %20 = arith.addf %19, %18 : vector<8xf32>
    %21 = arith.divf %19, %20 : vector<8xf32>
    %22 = vector.shape_cast %21 : vector<8xf32> to vector<1x8xf32>
    %c0_13 = arith.constant 0 : index
    %c0_14 = arith.constant 0 : index
    %c0_15 = arith.constant 0 : index
    %23 = vector.load %arg7[%c0_13, %c0_14, %c0_15] : memref<1x1x8xf32, #tpu.memory_space<vmem>>, vector<1x1x8xf32>
    %24 = vector.shape_cast %23 : vector<1x1x8xf32> to vector<1x8xf32>
    %25 = vector.shape_cast %22 : vector<1x8xf32> to vector<1x1x8xf32>
    tpu.vector_store %arg7[%c0_13, %c0_14, %c0_15], %25 {strides = array<i32>} : memref<1x1x8xf32, #tpu.memory_space<vmem>>, vector<1x1x8xf32>,
    return
  }
  func.func @transform_0(%arg0: i32) -> (i32, i32) {
    %c0_i32 = arith.constant 0 : i32
    %c0_i32_0 = arith.constant 0 : i32
    return %arg0, %c0_i32 : i32, i32
  }
  func.func @transform_1(%arg0: i32) -> (i32, i32) {
    %c0_i32 = arith.constant 0 : i32
    %c0_i32_0 = arith.constant 0 : i32
    return %arg0, %c0_i32 : i32, i32
  }
  func.func @transform_2(%arg0: i32) -> (i32, i32) {
    %c0_i32 = arith.constant 0 : i32
    %c0_i32_0 = arith.constant 0 : i32
    %c0_i32_1 = arith.constant 0 : i32
    return %c0_i32, %c0_i32_0 : i32, i32
  }
  func.func @transform_3(%arg0: i32) -> (i32, i32) {
    %c0_i32 = arith.constant 0 : i32
    %c0_i32_0 = arith.constant 0 : i32
    %c0_i32_1 = arith.constant 0 : i32
    return %c0_i32, %c0_i32_0 : i32, i32
  }
  func.func @transform_4(%arg0: i32) -> (i32, i32) {
    %c0_i32 = arith.constant 0 : i32
    %c0_i32_0 = arith.constant 0 : i32
    %c0_i32_1 = arith.constant 0 : i32
    return %c0_i32, %c0_i32_0 : i32, i32
  }
  func.func @transform_5(%arg0: i32) -> (i32, i32) {
    %c0_i32 = arith.constant 0 : i32
    %c0_i32_0 = arith.constant 0 : i32
    %c0_i32_1 = arith.constant 0 : i32
    return %c0_i32, %c0_i32_0 : i32, i32
  }
  func.func @transform_6(%arg0: i32) -> (i32, i32, i32) {
    %c0_i32 = arith.constant 0 : i32
    %c0_i32_0 = arith.constant 0 : i32
    %c0_i32_1 = arith.constant 0 : i32
    return %arg0, %c0_i32, %c0_i32_0 : i32, i32, i32
  }
}

</mosaic_0001>

<llo_original>
// kernel: tpu_custom_call.1
$region0: #{tpu_custom_call.1}
  #allocation0 [shape = 'u32[]', space=smem, size = 0x4, offset = 0x4, fixed_abs, tag = 'smem constant byte address 0x4 - core index']
  #allocation1 [shape = 'u32[72,128]{1,0:T(1,128)}', space=vmem, size = 0x9000, scoped, tag = 'internal scratch']
  #allocation2 [shape = 'f32[1,1]{1,0:T(1,128)S(6)}', space=smem, size = 0x200, scoped, tag = 'scoped memory for tpu_custom_call.1']
  %s0 = inlined_call_operand.hbm [shape: f32[8,32], index: 0, kind: input, shape index: {}]
  %s1 = inlined_call_operand.hbm [shape: f32[8,32], index: 1, kind: input, shape index: {}]
  %s2 = inlined_call_operand.hbm [shape: f32[32,32], index: 2, kind: input, shape index: {}]
  %s3 = inlined_call_operand.vmem [shape: f32[1,32], index: 3, kind: input, shape index: {}]
  %s4 = inlined_call_operand.vmem [shape: f32[1,32], index: 4, kind: input, shape index: {}]
  %s5 = inlined_call_operand.<no memory space> [shape: f32[1,1], index: 5, kind: input, shape index: {}]
  %s6 = inlined_call_operand.hbm [shape: f32[1,1,8], index: 6, kind: output, shape index: {}]
  %s7 = sld [smem:[#allocation0]]
  $region46: #{tpu_custom_call.1} parent=0
    _
  %s9 = ssub.s32 1, %s7
  %s10 = scalar_select 0, %s9, %s7
  %11 = sst [smem:[#allocation2]] %s5
  $region1: #{tpu_custom_call.1} parent=0
    #allocation3 [shape = 'u8[4096]{0}', space=vmem, size = 0x1000, scoped, tag = 'input window, operand 0, single buffered']
    #allocation4 [shape = 's32[1]{0}', space=sflag, size = 0x4, scoped, tag = 'scoped memory for tpu_custom_call.1']
    #allocation5 [shape = 's32[1]{0}', space=sflag, size = 0x4, scoped, tag = 'scoped memory for tpu_custom_call.1']
    #allocation6 [shape = 'u8[4096]{0}', space=vmem, size = 0x1000, scoped, tag = 'input window, operand 1, single buffered']
    #allocation7 [shape = 's32[1]{0}', space=sflag, size = 0x4, scoped, tag = 'scoped memory for tpu_custom_call.1']
    #allocation8 [shape = 'u8[16384]{0}', space=vmem, size = 0x4000, scoped, tag = 'input window, operand 2, single buffered']
    #allocation9 [shape = 'u8[512]{0}', space=vmem, size = 0x400, scoped, tag = 'output window, operand 0, single buffered']
    %12 = vsyncpa [#allocation4], 0
    %13 = vsyncpa [#allocation7], 0
    %14 = vsyncpa [#allocation5], 0
    // Predicated region
    $region2: #{tpu_custom_call.1} parent=1 // pred_check
      _
    $region3: #{tpu_custom_call.1} parent=1 // pred_check_branch
      %16 = sbr.rel (0) target = $region5
    $region4: #{tpu_custom_call.1} parent=1 // pred_region
      %18 = vsyncadd [#allocation4], 0
      %s20 = sshll.u32 %s0, 4
      %s21 = int_to_ptr.hbm [resolvable:$true] %s20
      %s22 = sshll.u32 [#allocation3], 4
      %s23 = int_to_ptr.vmem [resolvable:$true] %s22
      %25 = dma.hbm_to_vmem [thread:$0]  %s21, 128, %s23, [#allocation4]
    $region5: #{tpu_custom_call.1} parent=1 // pred_fallthru
      _
    // Predicated region
    $region6: #{tpu_custom_call.1} parent=1 // pred_check
      _
    $region7: #{tpu_custom_call.1} parent=1 // pred_check_branch
      %27 = sbr.rel (0) target = $region9
    $region8: #{tpu_custom_call.1} parent=1 // pred_region
      %29 = vsyncadd [#allocation7], 0
      %s31 = sshll.u32 %s1, 4
      %s32 = int_to_ptr.hbm [resolvable:$true] %s31
      %s33 = sshll.u32 [#allocation6], 4
      %s34 = int_to_ptr.vmem [resolvable:$true] %s33
      %36 = dma.hbm_to_vmem [thread:$0]  %s32, 128, %s34, [#allocation7]
    $region9: #{tpu_custom_call.1} parent=1 // pred_fallthru
      _
    // Predicated region
    $region10: #{tpu_custom_call.1} parent=1 // pred_check
      _
    $region11: #{tpu_custom_call.1} parent=1 // pred_check_branch
      %38 = sbr.rel (0) target = $region13
    $region12: #{tpu_custom_call.1} parent=1 // pred_region
      %40 = vsyncadd [#allocation7], 0
      %s41 = sshll.u32 %s2, 4
      %s42 = int_to_ptr.hbm [resolvable:$true] %s41
      %s43 = sshll.u32 [#allocation8], 4
      %s44 = int_to_ptr.vmem [resolvable:$true] %s43
      %49 = dma.hbm_to_vmem [thread:$0]  %s42, 512, %s44, [#allocation7], 128, 128, 8
    $region13: #{tpu_custom_call.1} parent=1 // pred_fallthru
      _
    // Predicated region
    $region14: #{tpu_custom_call.1} parent=1 // pred_check
      _
    $region15: #{tpu_custom_call.1} parent=1 // pred_check_branch
      %51 = sbr.rel (0) target = $region17
    $region16: #{tpu_custom_call.1} parent=1 // pred_region
      _
    $region17: #{tpu_custom_call.1} parent=1 // pred_fallthru
      _
    // Predicated region
    $region18: #{tpu_custom_call.1} parent=1 // pred_check
      _
    $region19: #{tpu_custom_call.1} parent=1 // pred_check_branch
      %53 = sbr.rel (0) target = $region21
    $region20: #{tpu_custom_call.1} parent=1 // pred_region
      _
    $region21: #{tpu_custom_call.1} parent=1 // pred_fallthru
      _
    // Predicated region
    $region22: #{tpu_custom_call.1} parent=1 // pred_check
      _
    $region23: #{tpu_custom_call.1} parent=1 // pred_check_branch
      %55 = sbr.rel (0) target = $region25
    $region24: #{tpu_custom_call.1} parent=1 // pred_region
      _
    $region25: #{tpu_custom_call.1} parent=1 // pred_fallthru
      _
    // Predicated region
    $region26: #{tpu_custom_call.1} parent=1 // pred_check
      _
    $region27: #{tpu_custom_call.1} parent=1 // pred_check_branch
      %57 = sbr.rel (0) target = $region29
    $region28: #{tpu_custom_call.1} parent=1 // pred_region
      %59 = dma.done [#allocation4], 128
    $region29: #{tpu_custom_call.1} parent=1 // pred_fallthru
      _
    // Predicated region
    $region30: #{tpu_custom_call.1} parent=1 // pred_check
      _
    $region31: #{tpu_custom_call.1} parent=1 // pred_check_branch
      %61 = sbr.rel (0) target = $region33
    $region32: #{tpu_custom_call.1} parent=1 // pred_region
      %63 = dma.done [#allocation7], 128
    $region33: #{tpu_custom_call.1} parent=1 // pred_fallthru
      _
    // Predicated region
    $region34: #{tpu_custom_call.1} parent=1 // pred_check
      _
    $region35: #{tpu_custom_call.1} parent=1 // pred_check_branch
      %65 = sbr.rel (0) target = $region37
    $region36: #{tpu_custom_call.1} parent=1 // pred_region
      %67 = dma.done [#allocation7], 512
    $region37: #{tpu_custom_call.1} parent=1 // pred_fallthru
      _
    %v68 = vld [vmem:[#allocation3] sm:$0xff]
    %v69 = vld [vmem:[#allocation6] sm:$0xff]
    %v70 = vld [vmem:[#allocation8] sm:$0xff]
    %v71 = vld [vmem:[#allocation8 + $0x8] sm:$0xff]
    %v72 = vld [vmem:[#allocation8 + $0x10] sm:$0xff]
    %v73 = vld [vmem:[#allocation8 + $0x18] sm:$0xff]
    %vm74 = vcmask 261120
    %v76 = vsel %vm74, %v68, 0
    %78 = vmatpush.msra.mxu0 0.0
    %79 = vmatpush.msra.mxu0 0.0
    %80 = vmatpush.msra.mxu0 0.0
    %81 = vmatpush.msra.mxu0 0.0
    %82 = vmatpush.msra.mxu0 0.0
    %83 = vmatpush.msra.mxu0 0.0
    %84 = vmatpush.msra.mxu0 0.0
    %85 = vmatpush.msra.mxu0 0.0
    %86 = vmatpush.msra.mxu0 0.0
    %87 = vmatpush.msra.mxu0 0.0
    %88 = vmatpush.msra.mxu0 0.0
    %89 = vmatpush.msra.mxu0 0.0
    %90 = vmatpush.msra.mxu0 %v73
    %91 = vmatpush.msra.mxu0 %v72
    %92 = vmatpush.msra.mxu0 %v71
    %93 = vmatpush.msra.mxu0 %v70
    %94 = vmatmul.f32.gmra.mxu0 %v76
    %v95 = vpop.f32.mrf.mxu0
    %v96 = vadd.f32 0.0, %v95
    %97 = vdwg.mxu0
    %v98 = vmul.f32 %v96, %v69
    %v99 = vld [vmem:[%s3] sm:$0x1]
    %v101 = vperm.slane %v99, 0
    %v103 = vmul.f32 %v68, %v101
    %v104 = vadd.f32 %v98, %v103
    %v105 = vld [vmem:[%s4] sm:$0x1]
    %v107 = vperm.slane %v105, 0
    %v109 = vmul.f32 %v69, %v107
    %v110 = vadd.f32 %v104, %v109
    %v111 = vsel %vm74, %v110, 0.0
    %112 = vadd.xlane.f32.xlu0 %v111
    %v113 = vpop.xlane.xlu0 %112
    %s114 = sld [smem:[#allocation2]]
    %v115 = vstv %s114
    %v116 = vadd.f32 %v113, %v115
    %v117 = vxor.u32 %v116, 2147483648
    %v118 = vmul.f32 %v117, 1.442695
    %v119 = vpow.pop %v118
    %v120 = vadd.f32 %v119, 1.0
    %v121 = vrcp.pop %v120
    %v122 = vmul.f32 %v120, %v121
    %v123 = vsub.f32 1.0, %v122
    %v124 = vmul.f32 %v121, %v123
    %v125 = vadd.f32 %v121, %v124
    %vm126 = vweird.f32 %v120
    %vm127 = vweird.f32 %v121
    %vm128 = vmor %vm126, %vm127
    %v129 = vsel %vm128, %v121, %v125
    %v130 = vand.u32 2147483647, %v120
    %vm131 = vcmp.eq.f32.partialorder %v130, 8.507059e+37
    %v132 = vand.u32 %v120, 2147483648
    %v133 = vor.u32 1.1754944e-38, %v132
    %v134 = vsel %vm131, %v133, %v129
    %v135 = vmul.f32 1.0, %v134
    %v137 = vlaneseq
    %v138 = vand.u32 %v137, 127
    %v139 = vperm.slane %v135, %v138
    %vm141 = vcmask 57344
    %142 = vst.msk [vmem:[#allocation9] sm:$0x1] %vm141, %v139
    // Predicated region
    $region38: #{tpu_custom_call.1} parent=1 // pred_check
      _
    $region39: #{tpu_custom_call.1} parent=1 // pred_check_branch
      %144 = sbr.rel (0) target = $region41
    $region40: #{tpu_custom_call.1} parent=1 // pred_region
      %146 = vsyncadd [#allocation5], 0
      %s148 = sshll.u32 [#allocation9], 4
      %s149 = int_to_ptr.vmem [resolvable:$true] %s148
      %s150 = sshll.u32 %s6, 4
      %s151 = int_to_ptr.hbm [resolvable:$true] %s150
      %153 = dma.vmem_to_hbm [thread:$0]  %s149, 16, %s151, [#allocation5]
    $region41: #{tpu_custom_call.1} parent=1 // pred_fallthru
      _
    // Predicated region
    $region42: #{tpu_custom_call.1} parent=1 // pred_check
      _
    $region43: #{tpu_custom_call.1} parent=1 // pred_check_branch
      %155 = sbr.rel (0) target = $region45
    $region44: #{tpu_custom_call.1} parent=1 // pred_region
      %157 = dma.done [#allocation5], 16
    $region45: #{tpu_custom_call.1} parent=1 // pred_fallthru
      _
    %158 = vsyncpa [#allocation4], 1
    %159 = vsyncpa [#allocation7], 1
    %160 = vsyncpa [#allocation5], 1

</llo_original>
